<compile_context>
chip_gen: v7x
topology: tpu7x:2x2x1
jax: 0.10.0
libtpu: 0.0.40
codegen_flags: <defaults>
</compile_context>

<pallas_src>
import math

import jax
import jax.numpy as jnp
from jax.experimental import pallas as pl
from jax.experimental.pallas import tpu as pltpu

_LANE = 128


def _mix_kernel(p_ref, *refs):
    # p_ref: SMEM (S,) float32 mixing probabilities.
    # refs:  S input VMEM tiles of shape (block_rows, 128) + 1 output tile.
    *x_refs, o_ref = refs
    acc = x_refs[0][...].astype(jnp.float32) * p_ref[0]
    for s in range(1, len(x_refs)):
        acc = acc + x_refs[s][...].astype(jnp.float32) * p_ref[s]
    o_ref[...] = acc.astype(o_ref.dtype)


def data_mix(xs, weight):
    """softmax(weight)-weighted sum of the sources in `xs` (DataMixLayer.forward)."""
    xs = [jnp.asarray(x) for x in xs]
    weight = jnp.asarray(weight, jnp.float32).reshape(-1)
    num_sources = int(weight.shape[0])
    assert len(xs) == num_sources, (
        "The number of sources should be %d, %d found." % (num_sources, len(xs)))
    shape = xs[0].shape
    in_dtype = xs[0].dtype
    for x in xs:
        assert x.shape == shape and x.dtype == in_dtype

    # Numerically stable softmax over the S weights (same formula as torch).
    rel = weight - jnp.max(weight)
    exp_rel = jnp.exp(rel)
    probs = (exp_rel / jnp.sum(exp_rel)).astype(jnp.float32)

    # torch promotion of float32 probability * x.
    out_dtype = jnp.promote_types(in_dtype, jnp.float32)

    # Lane-dense 2D view of every source: (rows, 128).
    m = math.prod(shape)
    m_pad = ((m + _LANE - 1) // _LANE) * _LANE
    flat = [x.reshape(-1) for x in xs]
    if m_pad != m:
        flat = [jnp.pad(f, (0, m_pad - m)) for f in flat]
    rows = m_pad // _LANE
    srcs = [f.reshape(rows, _LANE) for f in flat]

    # Pick the largest row-block whose double-buffered in+out footprint fits a
    # conservative 16 MiB VMEM budget.
    in_bytes = jnp.dtype(in_dtype).itemsize
    out_bytes = jnp.dtype(out_dtype).itemsize
    bytes_per_row = 2 * _LANE * (num_sources * in_bytes + out_bytes)
    budget = 16 * 1024 * 1024
    block_rows = max(8, (budget // bytes_per_row) // 8 * 8)
    block_rows = min(block_rows, rows)
    if rows < 8:
        block_rows = rows  # full-extent block (allowed even when < 8)

    num_blocks = (rows + block_rows - 1) // block_rows
    tile_spec = pl.BlockSpec((block_rows, _LANE), lambda i: (i, 0))

    out2d = pl.pallas_call(
        _mix_kernel,
        out_shape=jax.ShapeDtypeStruct((rows, _LANE), out_dtype),
        grid_spec=pltpu.PrefetchScalarGridSpec(
            num_scalar_prefetch=0,
            grid=(num_blocks,),
            in_specs=[pl.BlockSpec(memory_space=pltpu.MemorySpace.SMEM)]
            + [tile_spec] * num_sources,
            out_specs=tile_spec,
        ),
        compiler_params=pltpu.CompilerParams(
            dimension_semantics=("parallel",),
            vmem_limit_bytes=32 * 1024 * 1024,
        ),
    )(probs, *srcs)

    return out2d.reshape(m_pad)[:m].reshape(shape)


if __name__ == "__main__":
    num_sources = 3
    key = jax.random.PRNGKey(0)
    kw, *ks = jax.random.split(key, num_sources + 1)

    # Deterministic "module parameter" (the learnable per-source logits) and
    # small NCHW sources, mirroring DataMixLayer(num_sources=3).
    weight = jax.random.normal(kw, (num_sources,), dtype=jnp.float32)
    xs = [jax.random.normal(k, (2, 4, 16, 16), dtype=jnp.float32) for k in ks]

    out = data_mix(xs, weight)
    out = jax.block_until_ready(out)

    # Pure-JAX reference with identical semantics to the PyTorch forward.
    rel = weight - jnp.max(weight)
    probs = jnp.exp(rel) / jnp.sum(jnp.exp(rel))
    ref = sum(probs[i] * xs[i] for i in range(num_sources))

    assert out.shape == ref.shape and out.dtype == ref.dtype
    assert jnp.allclose(out, ref, rtol=1e-6, atol=1e-6)
    print("KERNEL_OK")
</pallas_src>

<mosaic_0001>
module attributes {stable_mosaic.version = 11 : i64} {
  func.func @_mix_kernel(%arg0: i32, %arg1: memref<3xf32, #tpu.memory_space<smem>>, %arg2: memref<16x128xf32, #tpu.memory_space<vmem>>, %arg3: memref<16x128xf32, #tpu.memory_space<vmem>>, %arg4: memref<16x128xf32, #tpu.memory_space<vmem>>, %arg5: memref<16x128xf32, #tpu.memory_space<vmem>>) attributes {dimension_semantics = [#tpu.dimension_semantics<parallel>], iteration_bounds = array<i64: 1>, scalar_prefetch = 0 : i64, scratch_operands = 0 : i64, tpu.core_type = #tpu.core_type<tc>, window_params = [{transform_indices = @transform_0, window_bounds = array<i64: 3>}, {transform_indices = @transform_1, window_bounds = array<i64: 16, 128>}, {transform_indices = @transform_2, window_bounds = array<i64: 16, 128>}, {transform_indices = @transform_3, window_bounds = array<i64: 16, 128>}, {transform_indices = @transform_4, window_bounds = array<i64: 16, 128>}]} {
    %c0 = arith.constant 0 : index
    %c0_0 = arith.constant 0 : index
    %0 = vector.load %arg2[%c0, %c0_0] : memref<16x128xf32, #tpu.memory_space<vmem>>, vector<16x128xf32>
    %c0_1 = arith.constant 0 : index
    %1 = memref.load %arg1[%c0_1] : memref<3xf32, #tpu.memory_space<smem>>
    %2 = vector.broadcast %1 : f32 to vector<16x128xf32>
    %3 = arith.mulf %0, %2 : vector<16x128xf32>
    %c0_2 = arith.constant 0 : index
    %c0_3 = arith.constant 0 : index
    %4 = vector.load %arg3[%c0_2, %c0_3] : memref<16x128xf32, #tpu.memory_space<vmem>>, vector<16x128xf32>
    %c1 = arith.constant 1 : index
    %5 = memref.load %arg1[%c1] : memref<3xf32, #tpu.memory_space<smem>>
    %6 = vector.broadcast %5 : f32 to vector<16x128xf32>
    %7 = arith.mulf %4, %6 : vector<16x128xf32>
    %8 = arith.addf %3, %7 : vector<16x128xf32>
    %c0_4 = arith.constant 0 : index
    %c0_5 = arith.constant 0 : index
    %9 = vector.load %arg4[%c0_4, %c0_5] : memref<16x128xf32, #tpu.memory_space<vmem>>, vector<16x128xf32>
    %c2 = arith.constant 2 : index
    %10 = memref.load %arg1[%c2] : memref<3xf32, #tpu.memory_space<smem>>
    %11 = vector.broadcast %10 : f32 to vector<16x128xf32>
    %12 = arith.mulf %9, %11 : vector<16x128xf32>
    %13 = arith.addf %8, %12 : vector<16x128xf32>
    %c0_6 = arith.constant 0 : index
    %c0_7 = arith.constant 0 : index
    %14 = vector.load %arg5[%c0_6, %c0_7] : memref<16x128xf32, #tpu.memory_space<vmem>>, vector<16x128xf32>
    tpu.vector_store %arg5[%c0_6, %c0_7], %13 {strides = array<i32>} : memref<16x128xf32, #tpu.memory_space<vmem>>, vector<16x128xf32>,
    return
  }
  func.func @transform_0(%arg0: i32) -> i32 {
    %c0_i32 = arith.constant 0 : i32
    %c0_i32_0 = arith.constant 0 : i32
    return %c0_i32 : i32
  }
  func.func @transform_1(%arg0: i32) -> (i32, i32) {
    %c0_i32 = arith.constant 0 : i32
    %c0_i32_0 = arith.constant 0 : i32
    return %arg0, %c0_i32 : i32, i32
  }
  func.func @transform_2(%arg0: i32) -> (i32, i32) {
    %c0_i32 = arith.constant 0 : i32
    %c0_i32_0 = arith.constant 0 : i32
    return %arg0, %c0_i32 : i32, i32
  }
  func.func @transform_3(%arg0: i32) -> (i32, i32) {
    %c0_i32 = arith.constant 0 : i32
    %c0_i32_0 = arith.constant 0 : i32
    return %arg0, %c0_i32 : i32, i32
  }
  func.func @transform_4(%arg0: i32) -> (i32, i32) {
    %c0_i32 = arith.constant 0 : i32
    %c0_i32_0 = arith.constant 0 : i32
    return %arg0, %c0_i32 : i32, i32
  }
}

</mosaic_0001>

<llo_original>
// kernel: tpu_custom_call.1
$region0: #{tpu_custom_call.1}
  #allocation0 [shape = 'u32[]', space=smem, size = 0x4, offset = 0x4, fixed_abs, tag = 'smem constant byte address 0x4 - core index']
  #allocation1 [shape = 'u32[144,128]{1,0:T(1,128)}', space=vmem, size = 0x12000, scoped, tag = 'internal scratch']
  %s0 = inlined_call_operand.hbm [shape: f32[3], index: 0, kind: input, shape index: {}]
  %s1 = inlined_call_operand.hbm [shape: f32[16,128], index: 1, kind: input, shape index: {}]
  %s2 = inlined_call_operand.hbm [shape: f32[16,128], index: 2, kind: input, shape index: {}]
  %s3 = inlined_call_operand.hbm [shape: f32[16,128], index: 3, kind: input, shape index: {}]
  %s4 = inlined_call_operand.hbm [shape: f32[16,128], index: 4, kind: output, shape index: {}]
  %s5 = sld [smem:[#allocation0]]
  $region42: #{tpu_custom_call.1} parent=0
    _
  %s7 = ssub.s32 1, %s5
  %s8 = scalar_select 0, %s7, %s5
  $region1: #{tpu_custom_call.1} parent=0
    #allocation2 [shape = 'u8[512]{0}', space=smem, size = 0x200, scoped, tag = 'input window, operand 0, single buffered']
    #allocation3 [shape = 's32[1]{0}', space=sflag, size = 0x4, scoped, tag = 'scoped memory for tpu_custom_call.1']
    #allocation4 [shape = 's32[1]{0}', space=sflag, size = 0x4, scoped, tag = 'scoped memory for tpu_custom_call.1']
    #allocation5 [shape = 's32[1]{0}', space=sflag, size = 0x4, scoped, tag = 'scoped memory for tpu_custom_call.1']
    #allocation6 [shape = 'u8[8192]{0}', space=vmem, size = 0x2000, scoped, tag = 'input window, operand 1, single buffered']
    #allocation7 [shape = 'u8[8192]{0}', space=vmem, size = 0x2000, scoped, tag = 'input window, operand 2, single buffered']
    #allocation8 [shape = 's32[1]{0}', space=sflag, size = 0x4, scoped, tag = 'scoped memory for tpu_custom_call.1']
    #allocation9 [shape = 'u8[8192]{0}', space=vmem, size = 0x2000, scoped, tag = 'input window, operand 3, single buffered']
    #allocation10 [shape = 'u8[8192]{0}', space=vmem, size = 0x2000, scoped, tag = 'output window, operand 0, single buffered']
    %9 = vsyncpa [#allocation5], 0
    %10 = vsyncpa [#allocation3], 0
    %11 = vsyncpa [#allocation8], 0
    %12 = vsyncpa [#allocation4], 0
    // Predicated region
    $region2: #{tpu_custom_call.1} parent=1 // pred_check
      _
    $region3: #{tpu_custom_call.1} parent=1 // pred_check_branch
      %14 = sbr.rel (0) target = $region5
    $region4: #{tpu_custom_call.1} parent=1 // pred_region
      %s16 = ssub.s32 16, 16
      %17 = vsyncadd [#allocation5], %s16
      %20 = dma.hbm_to_smem %s0, 16, [#allocation2], [#allocation5]
    $region5: #{tpu_custom_call.1} parent=1 // pred_fallthru
      _
    // Predicated region
    $region6: #{tpu_custom_call.1} parent=1 // pred_check
      _
    $region7: #{tpu_custom_call.1} parent=1 // pred_check_branch
      %22 = sbr.rel (0) target = $region9
    $region8: #{tpu_custom_call.1} parent=1 // pred_region
      %s24 = ssub.s32 256, 256
      %25 = vsyncadd [#allocation3], %s24
      %s26 = sshll.u32 [#allocation6], 4
      %s27 = int_to_ptr.vmem [resolvable:$true] %s26
      %32 = dma.hbm_to_vmem [thread:$0]  %s1, 256, %s27, [#allocation3], 128, 128, 8
    $region9: #{tpu_custom_call.1} parent=1 // pred_fallthru
      _
    // Predicated region
    $region10: #{tpu_custom_call.1} parent=1 // pred_check
      _
    $region11: #{tpu_custom_call.1} parent=1 // pred_check_branch
      %34 = sbr.rel (0) target = $region13
    $region12: #{tpu_custom_call.1} parent=1 // pred_region
      %s36 = ssub.s32 256, 256
      %37 = vsyncadd [#allocation8], %s36
      %s38 = sshll.u32 [#allocation7], 4
      %s39 = int_to_ptr.vmem [resolvable:$true] %s38
      %44 = dma.hbm_to_vmem [thread:$0]  %s2, 256, %s39, [#allocation8], 128, 128, 8
    $region13: #{tpu_custom_call.1} parent=1 // pred_fallthru
      _
    // Predicated region
    $region14: #{tpu_custom_call.1} parent=1 // pred_check
      _
    $region15: #{tpu_custom_call.1} parent=1 // pred_check_branch
      %46 = sbr.rel (0) target = $region17
    $region16: #{tpu_custom_call.1} parent=1 // pred_region
      %s48 = ssub.s32 256, 256
      %49 = vsyncadd [#allocation8], %s48
      %s50 = sshll.u32 [#allocation9], 4
      %s51 = int_to_ptr.vmem [resolvable:$true] %s50
      %56 = dma.hbm_to_vmem [thread:$0]  %s3, 256, %s51, [#allocation8], 128, 128, 8
    $region17: #{tpu_custom_call.1} parent=1 // pred_fallthru
      _
    // Predicated region
    $region18: #{tpu_custom_call.1} parent=1 // pred_check
      _
    $region19: #{tpu_custom_call.1} parent=1 // pred_check_branch
      %58 = sbr.rel (0) target = $region21
    $region20: #{tpu_custom_call.1} parent=1 // pred_region
      %59 = dma.done [#allocation5], 16
    $region21: #{tpu_custom_call.1} parent=1 // pred_fallthru
      _
    // Predicated region
    $region22: #{tpu_custom_call.1} parent=1 // pred_check
      _
    $region23: #{tpu_custom_call.1} parent=1 // pred_check_branch
      %61 = sbr.rel (0) target = $region25
    $region24: #{tpu_custom_call.1} parent=1 // pred_region
      %62 = dma.done [#allocation3], 256
    $region25: #{tpu_custom_call.1} parent=1 // pred_fallthru
      _
    // Predicated region
    $region26: #{tpu_custom_call.1} parent=1 // pred_check
      _
    $region27: #{tpu_custom_call.1} parent=1 // pred_check_branch
      %64 = sbr.rel (0) target = $region29
    $region28: #{tpu_custom_call.1} parent=1 // pred_region
      %65 = dma.done [#allocation8], 256
    $region29: #{tpu_custom_call.1} parent=1 // pred_fallthru
      _
    // Predicated region
    $region30: #{tpu_custom_call.1} parent=1 // pred_check
      _
    $region31: #{tpu_custom_call.1} parent=1 // pred_check_branch
      %67 = sbr.rel (0) target = $region33
    $region32: #{tpu_custom_call.1} parent=1 // pred_region
      %68 = dma.done [#allocation8], 256
    $region33: #{tpu_custom_call.1} parent=1 // pred_fallthru
      _
    %69 = sfence
    %v70 = vld [vmem:[#allocation6] sm:$0xff]
    %v71 = vld [vmem:[#allocation6 + $0x8] sm:$0xff]
    %s72 = sld [smem:[#allocation2]]
    %v73 = vstv %s72
    %v74 = vmul.f32 %v70, %v73
    %v75 = vmul.f32 %v71, %v73
    %v76 = vld [vmem:[#allocation7] sm:$0xff]
    %v77 = vld [vmem:[#allocation7 + $0x8] sm:$0xff]
    %s78 = sld [smem:[#allocation2 + $0x1]]
    %v79 = vstv %s78
    %v80 = vmul.f32 %v76, %v79
    %v81 = vmul.f32 %v77, %v79
    %v82 = vadd.f32 %v74, %v80
    %v83 = vadd.f32 %v75, %v81
    %v84 = vld [vmem:[#allocation9] sm:$0xff]
    %v85 = vld [vmem:[#allocation9 + $0x8] sm:$0xff]
    %s86 = sld [smem:[#allocation2 + $0x2]]
    %v87 = vstv %s86
    %v88 = vmul.f32 %v84, %v87
    %v89 = vmul.f32 %v85, %v87
    %v90 = vadd.f32 %v82, %v88
    %v91 = vadd.f32 %v83, %v89
    %92 = vst [vmem:[#allocation10] sm:$0xff] %v90
    %93 = vst [vmem:[#allocation10 + $0x8] sm:$0xff] %v91
    // Predicated region
    $region34: #{tpu_custom_call.1} parent=1 // pred_check
      _
    $region35: #{tpu_custom_call.1} parent=1 // pred_check_branch
      %95 = sbr.rel (0) target = $region37
    $region36: #{tpu_custom_call.1} parent=1 // pred_region
      %s97 = ssub.s32 256, 256
      %98 = vsyncadd [#allocation4], %s97
      %s99 = sshll.u32 [#allocation10], 4
      %s100 = int_to_ptr.vmem [resolvable:$true] %s99
      %105 = dma.vmem_to_hbm [thread:$0]  %s100, 256, %s4, [#allocation4], 128, 128, 8
    $region37: #{tpu_custom_call.1} parent=1 // pred_fallthru
      _
    // Predicated region
    $region38: #{tpu_custom_call.1} parent=1 // pred_check
      _
    $region39: #{tpu_custom_call.1} parent=1 // pred_check_branch
      %107 = sbr.rel (0) target = $region41
    $region40: #{tpu_custom_call.1} parent=1 // pred_region
      %108 = dma.done [#allocation4], 256
    $region41: #{tpu_custom_call.1} parent=1 // pred_fallthru
      _
    %109 = vsyncpa [#allocation3], 1
    %110 = vsyncpa [#allocation8], 1
    %111 = vsyncpa [#allocation4], 1
    %112 = vsyncpa [#allocation5], 1

</llo_original>
